<compile_context>
chip_gen: v7x
topology: tpu7x:2x2x1
jax: 0.10.0
libtpu: 0.0.40
codegen_flags: <defaults>
</compile_context>

<pallas_src>
import math
from functools import partial

import numpy as np
import jax
import jax.numpy as jnp
from jax.experimental import pallas as pl
from jax.experimental.pallas import tpu as pltpu


LANE = 128  # output lane width; input blocks are 2*LANE wide (interleaved I/Q)


def _cal_avg_power(order: int) -> float:
    avg_power = []
    for i in range(int(math.sqrt(order) / 2)):
        avg_power.append((i + 0.5) ** 2)
    avg_power = np.array(avg_power)
    return float(np.sqrt(2 * np.sum(avg_power) / len(avg_power)))


def _round_up(x: int, m: int) -> int:
    return -(-x // m) * m


def _make_pack_matrix(order: int, lane: int) -> jnp.ndarray:
    """(2*lane, lane) bf16 matrix folding de-interleave + bit packing.

    out[:, c] = b[:, 2c] * 1 + b[:, 2c+1] * 2**half_bits
    i.e. even input lanes (I) contribute the low bits, odd lanes (Q) the high
    bits.  All values are small integers, so the bf16 matmul with f32
    accumulation is exact (results <= order-1).
    """
    half_bits = int(math.log2(order)) // 2
    p = np.zeros((2 * lane, lane), dtype=np.float32)
    c = np.arange(lane)
    p[2 * c, c] = 1.0
    p[2 * c + 1, c] = float(2 ** half_bits)
    return jnp.asarray(p, dtype=jnp.bfloat16)


def _make_demod_kernel(order: int):
    n_bit = int(math.log2(order))
    avg_power = _cal_avg_power(order)
    offset = order ** 0.5 / 2 - 0.5          # 7.5  for order=256
    max_val = float(order ** 0.5 - 1)        # 15.0 for order=256
    half_bits = n_bit // 2                   # 4    for order=256
    out_scale = 2.0 / 255.0                  # spec hard-codes /255

    def kernel(x_ref, p_ref, o_ref):
        # x_ref: (block_rows, 2*lane) raw interleaved [I,Q,I,Q,...] float32.
        # p_ref: (2*lane, lane)  bf16 de-interleave + pack matrix (resident).
        # o_ref: (block_rows, lane) float32 demodulated output.
        x = x_ref[...]
        yhat = x * avg_power + offset
        # hardtanh(0, max) followed by .int() (truncation is exact: values >= 0)
        g = jnp.clip(yhat, 0.0, max_val).astype(jnp.int32)
        # gray -> binary: b = g ^ (g>>1) ^ ... ^ (g>>(half_bits-1)), log-folded
        # (extra shifted terms >= half_bits vanish since g < 2**half_bits).
        b = g
        s = 1
        while s < half_bits:
            b = b ^ (b >> s)
            s <<= 1
        bf = b.astype(jnp.bfloat16)          # exact: values in [0, 2**half_bits)
        # De-interleave even/odd lanes and pack (bq << half_bits) | bi in one
        # exact MXU matmul; result is an integer-valued f32 in [0, order-1].
        packed = jnp.dot(bf, p_ref[...], preferred_element_type=jnp.float32)
        o_ref[...] = packed * out_scale - 1.0

    return kernel


@partial(jax.jit, static_argnames=("order", "modulating", "lane",
                                   "max_block_rows", "target_grid_steps"))
def qam_demodulate(inputs, order: int = 256, modulating: bool = True,
                   *, lane: int = LANE, max_block_rows: int = 2048,
                   target_grid_steps: int = 4):
    """QAMDemodulator.forward.  inputs: (B, N, 2) float32 -> (B, N) float32."""
    if not modulating:
        return inputs

    B, N, C = inputs.shape
    assert C == 2, "last dim must carry exactly [I, Q]"
    total = B * N

    # Free reshape of the raw interleaved buffer -> lane-dense rows of width
    # 2*lane (even lanes = I, odd lanes = Q).  No planar transpose HBM pass.
    flat = inputs.reshape(2 * total)

    if total % lane == 0:
        rows = total // lane
        ragged = False
    else:
        # Ragged fallback: pad the flat buffer by < lane elements (one copy).
        # TODO(synk): a masked tail pallas_call could avoid the pad/trim copies.
        rows = pl.cdiv(total, lane)
        flat = jnp.pad(flat, (0, 2 * (rows * lane - total)))
        ragged = True
    x2d = flat.reshape(rows, 2 * lane)

    # block_rows: aim for >= target_grid_steps grid steps (keeps both v7x TCs
    # busy and the DMA pipeline primed) while capping per-step VMEM footprint.
    block_rows = _round_up(pl.cdiv(rows, target_grid_steps), 8)
    block_rows = max(8, min(block_rows, max_block_rows))
    if block_rows >= rows:
        block_rows = rows                    # single block == full array dims
    grid = (pl.cdiv(rows, block_rows),)      # partial last block is clamped

    kernel = _make_demod_kernel(order)
    pack = _make_pack_matrix(order, lane)

    cost = pl.CostEstimate(
        flops=int(rows * lane * (4 * lane + 24)),
        transcendentals=0,
        bytes_accessed=int(rows * lane * 12 + pack.size * 2),
    )

    out2d = pl.pallas_call(
        kernel,
        out_shape=jax.ShapeDtypeStruct((rows, lane), jnp.float32),
        grid_spec=pltpu.PrefetchScalarGridSpec(
            num_scalar_prefetch=0,
            grid=grid,
            in_specs=[
                pl.BlockSpec((block_rows, 2 * lane), lambda i: (i, 0)),
                pl.BlockSpec((2 * lane, lane), lambda i: (0, 0)),  # resident
            ],
            out_specs=pl.BlockSpec((block_rows, lane), lambda i: (i, 0)),
        ),
        compiler_params=pltpu.CompilerParams(
            dimension_semantics=("parallel",),
            vmem_limit_bytes=40 * 1024 * 1024,
        ),
        cost_estimate=cost,
    )(x2d, pack)

    if ragged:
        return out2d.reshape(-1)[:total].reshape(B, N)
    return out2d.reshape(B, N)               # free: rows * lane == total


def _reference(inputs, order: int = 256):
    """Pure-JAX reference mirroring the PyTorch QAMDemodulator.forward."""
    avg_power = _cal_avg_power(order)
    n_bit = int(math.log2(order))
    yhat = inputs * avg_power + order ** 0.5 / 2 - 0.5
    g = jnp.clip(yhat, 0.0, order ** 0.5 - 1).astype(jnp.int32)
    b = g
    n = g
    for _ in range(n_bit // 2 - 1):
        n = n >> 1
        b = b ^ n
    res = (b[:, :, 1] << (n_bit // 2)) | b[:, :, 0]
    return res.astype(jnp.float32) / 255.0 * 2.0 - 1.0


if __name__ == "__main__":
    key = jax.random.PRNGKey(0)

    # Case 1: small (B, N, 2) input, fast path, single full block.
    B, N = 2, 256
    x = jax.random.normal(key, (B, N, 2), dtype=jnp.float32)
    out = jax.block_until_ready(qam_demodulate(x, order=256, modulating=True))
    assert out.shape == (B, N) and out.dtype == jnp.float32
    np.testing.assert_allclose(np.asarray(out), np.asarray(_reference(x)),
                               rtol=1e-6, atol=1e-6)

    # Case 2: ragged size (total % 128 != 0) -> pad/trim fallback, 3-step grid.
    B2, N2 = 3, 1000
    x2 = jax.random.normal(jax.random.PRNGKey(1), (B2, N2, 2), dtype=jnp.float32)
    out2 = jax.block_until_ready(qam_demodulate(x2, order=256, modulating=True))
    np.testing.assert_allclose(np.asarray(out2), np.asarray(_reference(x2)),
                               rtol=1e-6, atol=1e-6)

    # Case 3: realistic model shape (N = size2 = 640): fast path, multi-step
    # grid with a partial (clamped) last block.
    B3, N3 = 4, 640
    x3 = jax.random.normal(jax.random.PRNGKey(2), (B3, N3, 2), dtype=jnp.float32)
    out3 = jax.block_until_ready(qam_demodulate(x3, order=256, modulating=True))
    np.testing.assert_allclose(np.asarray(out3), np.asarray(_reference(x3)),
                               rtol=1e-6, atol=1e-6)

    # modulating=False path is identity.
    ident = jax.block_until_ready(qam_demodulate(x, order=256, modulating=False))
    np.testing.assert_allclose(np.asarray(ident), np.asarray(x))

    print("KERNEL_OK")
</pallas_src>

<mosaic_0001>
module attributes {stable_mosaic.version = 11 : i64} {
  func.func @kernel(%arg0: i32, %arg1: memref<4x256xf32, #tpu.memory_space<vmem>>, %arg2: memref<256x128xbf16, #tpu.memory_space<vmem>>, %arg3: memref<4x128xf32, #tpu.memory_space<vmem>>) attributes {dimension_semantics = [#tpu.dimension_semantics<parallel>], iteration_bounds = array<i64: 1>, scalar_prefetch = 0 : i64, scratch_operands = 0 : i64, tpu.core_type = #tpu.core_type<tc>, window_params = [{transform_indices = @transform_0, window_bounds = array<i64: 4, 256>}, {pipeline_mode = #tpu.pipeline_mode<synchronous>, transform_indices = @transform_1, window_bounds = array<i64: 256, 128>}, {transform_indices = @transform_2, window_bounds = array<i64: 4, 128>}]} {
    %c0 = arith.constant 0 : index
    %c0_0 = arith.constant 0 : index
    %0 = vector.load %arg1[%c0, %c0_0] : memref<4x256xf32, #tpu.memory_space<vmem>>, vector<4x256xf32>
    %cst = arith.constant 6.51920223 : f32
    %1 = vector.broadcast %cst : f32 to vector<4x256xf32>
    %2 = arith.mulf %0, %1 : vector<4x256xf32>
    %cst_1 = arith.constant 7.500000e+00 : f32
    %3 = vector.broadcast %cst_1 : f32 to vector<4x256xf32>
    %4 = arith.addf %2, %3 : vector<4x256xf32>
    %cst_2 = arith.constant 0.000000e+00 : f32
    %cst_3 = arith.constant 1.500000e+01 : f32
    %5 = vector.broadcast %cst_2 : f32 to vector<4x256xf32>
    %6 = arith.maximumf %5, %4 : vector<4x256xf32>
    %7 = vector.broadcast %cst_3 : f32 to vector<4x256xf32>
    %8 = arith.minimumf %7, %6 : vector<4x256xf32>
    %9 = arith.fptosi %8 : vector<4x256xf32> to vector<4x256xi32>
    %c1_i32 = arith.constant 1 : i32
    %10 = vector.broadcast %c1_i32 : i32 to vector<4x256xi32>
    %11 = arith.shrsi %9, %10 : vector<4x256xi32>
    %12 = arith.xori %9, %11 : vector<4x256xi32>
    %c2_i32 = arith.constant 2 : i32
    %13 = vector.broadcast %c2_i32 : i32 to vector<4x256xi32>
    %14 = arith.shrsi %12, %13 : vector<4x256xi32>
    %15 = arith.xori %12, %14 : vector<4x256xi32>
    %16 = arith.sitofp %15 : vector<4x256xi32> to vector<4x256xbf16>
    %c0_4 = arith.constant 0 : index
    %c0_5 = arith.constant 0 : index
    %17 = vector.load %arg2[%c0_4, %c0_5] : memref<256x128xbf16, #tpu.memory_space<vmem>>, vector<256x128xbf16>
    %cst_6 = arith.constant dense<0.000000e+00> : vector<4x128xf32>
    %18 = tpu.matmul %16, %17, %cst_6 {dimension_numbers = #tpu.dot_dimension_numbers<[1], [0], [0], [1], [0, 0, 1, 1], [], []>} : vector<4x256xbf16>, vector<256x128xbf16>, vector<4x128xf32> -> vector<4x128xf32>
    %cst_7 = arith.constant 0.00784313772 : f32
    %19 = vector.broadcast %cst_7 : f32 to vector<4x128xf32>
    %20 = arith.mulf %18, %19 : vector<4x128xf32>
    %cst_8 = arith.constant 1.000000e+00 : f32
    %21 = vector.broadcast %cst_8 : f32 to vector<4x128xf32>
    %22 = arith.subf %20, %21 : vector<4x128xf32>
    %c0_9 = arith.constant 0 : index
    %c0_10 = arith.constant 0 : index
    %23 = vector.load %arg3[%c0_9, %c0_10] : memref<4x128xf32, #tpu.memory_space<vmem>>, vector<4x128xf32>
    tpu.vector_store %arg3[%c0_9, %c0_10], %22 {strides = array<i32>} : memref<4x128xf32, #tpu.memory_space<vmem>>, vector<4x128xf32>,
    return
  }
  func.func @transform_0(%arg0: i32) -> (i32, i32) {
    %c0_i32 = arith.constant 0 : i32
    %c0_i32_0 = arith.constant 0 : i32
    return %arg0, %c0_i32 : i32, i32
  }
  func.func @transform_1(%arg0: i32) -> (i32, i32) {
    %c0_i32 = arith.constant 0 : i32
    %c0_i32_0 = arith.constant 0 : i32
    %c0_i32_1 = arith.constant 0 : i32
    return %c0_i32, %c0_i32_0 : i32, i32
  }
  func.func @transform_2(%arg0: i32) -> (i32, i32) {
    %c0_i32 = arith.constant 0 : i32
    %c0_i32_0 = arith.constant 0 : i32
    return %arg0, %c0_i32 : i32, i32
  }
}

</mosaic_0001>

<llo_original>
// kernel: qam_demodulate.1
$region0: #{qam_demodulate.1}
  #allocation0 [shape = 'u32[]', space=smem, size = 0x4, offset = 0x4, fixed_abs, tag = 'smem constant byte address 0x4 - core index']
  #allocation1 [shape = 'u32[144,128]{1,0:T(1,128)}', space=vmem, size = 0x12000, scoped, tag = 'internal scratch']
  %s0 = inlined_call_operand.vmem [shape: f32[4,256], index: 0, kind: input, shape index: {}]
  %s1 = inlined_call_operand.vmem [shape: bf16[256,128], index: 1, kind: input, shape index: {}]
  %s2 = inlined_call_operand.vmem [shape: f32[4,128], index: 2, kind: output, shape index: {}]
  %s3 = sld [smem:[#allocation0]]
  $region18: #{qam_demodulate.1} parent=0
    _
  %s5 = ssub.s32 1, %s3
  %s6 = scalar_select 0, %s5, %s3
  // Predicated region
  $region2: #{qam_demodulate.1} parent=0 // pred_check
    _
  $region3: #{qam_demodulate.1} parent=0 // pred_check_branch
    %8 = sbr.rel (0) target = $region5
  $region4: #{qam_demodulate.1} parent=0 // pred_region
    _
  $region5: #{qam_demodulate.1} parent=0 // pred_fallthru
    _
  // Predicated region
  $region6: #{qam_demodulate.1} parent=0 // pred_check
    _
  $region7: #{qam_demodulate.1} parent=0 // pred_check_branch
    %10 = sbr.rel (0) target = $region9
  $region8: #{qam_demodulate.1} parent=0 // pred_region
    _
  $region9: #{qam_demodulate.1} parent=0 // pred_fallthru
    _
  %v12 = vld [vmem:[%s0] sm:$0xff]
  %v13 = vmul.f32 %v12, 6.519202
  %v14 = vadd.f32 %v13, 7.5
  %v15 = vmax.f32 %v14, 0.0
  %v16 = vmin.f32 %v15, 15.0
  %v17 = vcvt.f32.s32.to.zero.pseudo %v16
  %v18 = vshra.s32 %v17, 1
  %v19 = vxor.u32 %v17, %v18
  %v20 = vshra.s32 %v19, 2
  %v21 = vxor.u32 %v19, %v20
  %v22 = vcvt.s32.f32 %v21
  %v24 = vcombine.high %v22, %v22
  %v26 = vpack.c.bf16 %v22, %v22
  %v27 = vpack.c.bf16 %v24, %v24
  %v28 = vld [vmem:[%s1] sm:$0xf]
  %v29 = vld [vmem:[%s1 + $0x4] sm:$0xf]
  %v30 = vld [vmem:[%s1 + $0x8] sm:$0xf]
  %v31 = vld [vmem:[%s1 + $0xc] sm:$0xf]
  %v32 = vld [vmem:[%s1 + $0x10] sm:$0xf]
  %v33 = vld [vmem:[%s1 + $0x14] sm:$0xf]
  %v34 = vld [vmem:[%s1 + $0x18] sm:$0xf]
  %v35 = vld [vmem:[%s1 + $0x1c] sm:$0xf]
  %v36 = vld [vmem:[%s1 + $0x20] sm:$0xf]
  %v37 = vld [vmem:[%s1 + $0x24] sm:$0xf]
  %v38 = vld [vmem:[%s1 + $0x28] sm:$0xf]
  %v39 = vld [vmem:[%s1 + $0x2c] sm:$0xf]
  %v40 = vld [vmem:[%s1 + $0x30] sm:$0xf]
  %v41 = vld [vmem:[%s1 + $0x34] sm:$0xf]
  %v42 = vld [vmem:[%s1 + $0x38] sm:$0xf]
  %v43 = vld [vmem:[%s1 + $0x3c] sm:$0xf]
  %v44 = vld [vmem:[%s1 + $0x40] sm:$0xf]
  %v45 = vld [vmem:[%s1 + $0x44] sm:$0xf]
  %v46 = vld [vmem:[%s1 + $0x48] sm:$0xf]
  %v47 = vld [vmem:[%s1 + $0x4c] sm:$0xf]
  %v48 = vld [vmem:[%s1 + $0x50] sm:$0xf]
  %v49 = vld [vmem:[%s1 + $0x54] sm:$0xf]
  %v50 = vld [vmem:[%s1 + $0x58] sm:$0xf]
  %v51 = vld [vmem:[%s1 + $0x5c] sm:$0xf]
  %v52 = vld [vmem:[%s1 + $0x60] sm:$0xf]
  %v53 = vld [vmem:[%s1 + $0x64] sm:$0xf]
  %v54 = vld [vmem:[%s1 + $0x68] sm:$0xf]
  %v55 = vld [vmem:[%s1 + $0x6c] sm:$0xf]
  %v56 = vld [vmem:[%s1 + $0x70] sm:$0xf]
  %v57 = vld [vmem:[%s1 + $0x74] sm:$0xf]
  %v58 = vld [vmem:[%s1 + $0x78] sm:$0xf]
  %v59 = vld [vmem:[%s1 + $0x7c] sm:$0xf]
  %v92 = vunpack.c.l.b16 %v28
  %v93 = vunpack.c.l.b16 %v29
  %v94 = vunpack.c.l.b16 %v30
  %v95 = vunpack.c.l.b16 %v31
  %v96 = vunpack.c.l.b16 %v32
  %v97 = vunpack.c.l.b16 %v33
  %v98 = vunpack.c.l.b16 %v34
  %v99 = vunpack.c.l.b16 %v35
  %v100 = vunpack.c.l.b16 %v36
  %v101 = vunpack.c.l.b16 %v37
  %v102 = vunpack.c.l.b16 %v38
  %v103 = vunpack.c.l.b16 %v39
  %v104 = vunpack.c.l.b16 %v40
  %v105 = vunpack.c.l.b16 %v41
  %v106 = vunpack.c.l.b16 %v42
  %v107 = vunpack.c.l.b16 %v43
  %v108 = vunpack.c.l.b16 %v44
  %v109 = vunpack.c.l.b16 %v45
  %v110 = vunpack.c.l.b16 %v46
  %v111 = vunpack.c.l.b16 %v47
  %v112 = vunpack.c.l.b16 %v48
  %v113 = vunpack.c.l.b16 %v49
  %v114 = vunpack.c.l.b16 %v50
  %v115 = vunpack.c.l.b16 %v51
  %v116 = vunpack.c.l.b16 %v52
  %v117 = vunpack.c.l.b16 %v53
  %v118 = vunpack.c.l.b16 %v54
  %v119 = vunpack.c.l.b16 %v55
  %v120 = vunpack.c.l.b16 %v56
  %v121 = vunpack.c.l.b16 %v57
  %v122 = vunpack.c.l.b16 %v58
  %v123 = vunpack.c.l.b16 %v59
  %v124 = vpack.c.b16 %v93, %v92
  %v125 = vpack.c.b16 %v95, %v94
  %v126 = vpack.c.b16 %v97, %v96
  %v127 = vpack.c.b16 %v99, %v98
  %v128 = vpack.c.b16 %v101, %v100
  %v129 = vpack.c.b16 %v103, %v102
  %v130 = vpack.c.b16 %v105, %v104
  %v131 = vpack.c.b16 %v107, %v106
  %v132 = vpack.c.b16 %v109, %v108
  %v133 = vpack.c.b16 %v111, %v110
  %v134 = vpack.c.b16 %v113, %v112
  %v135 = vpack.c.b16 %v115, %v114
  %v136 = vpack.c.b16 %v117, %v116
  %v137 = vpack.c.b16 %v119, %v118
  %v138 = vpack.c.b16 %v121, %v120
  %v139 = vpack.c.b16 %v123, %v122
  %156 = vmatprep.subr.bf16.mxu0 0
  %157 = vmatpush1.bf16.msra.mxu0 %v124
  %158 = vmatprep.subr.bf16.mxu0 0
  %159 = vmatpush1.bf16.msra.mxu0 %v125
  %160 = vmatprep.subr.bf16.mxu0 0
  %161 = vmatpush1.bf16.msra.mxu0 %v126
  %162 = vmatprep.subr.bf16.mxu0 0
  %163 = vmatpush1.bf16.msra.mxu0 %v127
  %164 = vmatprep.subr.bf16.mxu0 0
  %165 = vmatpush1.bf16.msra.mxu0 %v128
  %166 = vmatprep.subr.bf16.mxu0 0
  %167 = vmatpush1.bf16.msra.mxu0 %v129
  %168 = vmatprep.subr.bf16.mxu0 0
  %169 = vmatpush1.bf16.msra.mxu0 %v130
  %170 = vmatprep.subr.bf16.mxu0 0
  %171 = vmatpush1.bf16.msra.mxu0 %v131
  %172 = vmatprep.subr.bf16.mxu0 0
  %173 = vmatpush1.bf16.msra.mxu0 %v132
  %174 = vmatprep.subr.bf16.mxu0 0
  %175 = vmatpush1.bf16.msra.mxu0 %v133
  %176 = vmatprep.subr.bf16.mxu0 0
  %177 = vmatpush1.bf16.msra.mxu0 %v134
  %178 = vmatprep.subr.bf16.mxu0 0
  %179 = vmatpush1.bf16.msra.mxu0 %v135
  %180 = vmatprep.subr.bf16.mxu0 0
  %181 = vmatpush1.bf16.msra.mxu0 %v136
  %182 = vmatprep.subr.bf16.mxu0 0
  %183 = vmatpush1.bf16.msra.mxu0 %v137
  %184 = vmatprep.subr.bf16.mxu0 0
  %185 = vmatpush1.bf16.msra.mxu0 %v138
  %186 = vmatprep.subr.bf16.mxu0 0
  %187 = vmatpush1.bf16.msra.mxu0 %v139
  %188 = vmatprep.mubr.bf16.mxu0 %v27
  %189 = vmatmul.mubr.bf16.gmra.mrb[0].mxu0 %v26
  %v190 = vpop.f32.mrb[0].mxu0
  %v191 = vadd.f32 0.0, %v190
  %v192 = vpop.f32.mrb[0].mxu0
  %v193 = vpop.f32.mrb[0].mxu0
  %v194 = vpop.f32.mrb[0].mxu0
  %195 = vdwg.mxu0
  %v196 = vmul.f32 %v191, 0.007843138
  %v197 = vsub.f32 %v196, 1.0
  %198 = vst [vmem:[%s2] sm:$0xf] %v197
  // Predicated region
  $region10: #{qam_demodulate.1} parent=0 // pred_check
    _
  $region11: #{qam_demodulate.1} parent=0 // pred_check_branch
    %200 = sbr.rel (0) target = $region13
  $region12: #{qam_demodulate.1} parent=0 // pred_region
    _
  $region13: #{qam_demodulate.1} parent=0 // pred_fallthru
    _
  // Predicated region
  $region14: #{qam_demodulate.1} parent=0 // pred_check
    _
  $region15: #{qam_demodulate.1} parent=0 // pred_check_branch
    %202 = sbr.rel (0) target = $region17
  $region16: #{qam_demodulate.1} parent=0 // pred_region
    _
  $region17: #{qam_demodulate.1} parent=0 // pred_fallthru
    _

</llo_original>
